<compile_context>
chip_gen: v5e
topology: v5e:2x2
jax: 0.10.0
libtpu: 0.0.40
codegen_flags: <defaults>
</compile_context>

<pallas_src>
import functools
import math

import jax
import jax.numpy as jnp
from jax import lax
from jax.experimental import pallas as pl
from jax.experimental.pallas import tpu as pltpu


# ---------------------------------------------------------------------------
# Generation-specific tiling configuration
# ---------------------------------------------------------------------------
def _tpu_generation():
    try:
        kind = jax.devices()[0].device_kind.lower()
    except Exception:
        kind = ""
    if "v5" in kind:
        return "v5e"
    if "v6" in kind:
        return "v6e"
    if "7" in kind:
        return "v7x"
    return "v6e"


_GEN = _tpu_generation()

# (tm, tn, tk) matmul tiles + scoped-VMEM budget per generation.
#  v5e: 4x128 MXU, smaller scoped VMEM -> modest tiles.
#  v6e: 2x256 MXU, 128 MiB VMEM -> MXU-shaped 256-wide tiles, big K tiles.
#  v7x: 2x256 MXU but only 64 MiB VMEM -> keep double-buffered tiles smaller.
_CFG = {
    "v5e": dict(tm=128, tn=128, tk=512, vmem=32 * 1024 * 1024),
    "v6e": dict(tm=256, tn=256, tk=512, vmem=64 * 1024 * 1024),
    "v7x": dict(tm=128, tn=256, tk=512, vmem=32 * 1024 * 1024),
}[_GEN]


def _pick_tile(dim, desired, align):
    """Largest `align`-multiple tile <= desired that divides dim, else full dim."""
    if dim <= desired:
        return dim
    t = (desired // align) * align
    while t >= align:
        if dim % t == 0:
            return t
        t -= align
    return dim


def _cparams(semantics):
    return pltpu.CompilerParams(dimension_semantics=semantics,
                                vmem_limit_bytes=_CFG["vmem"])


def _maybe_gelu(y, activation):
    if activation == "gelu":
        # tanh-approximation of GELU.
        # TODO(synk): HF RoBERTa uses the erf-based GELU; tanh approx used here.
        y = 0.5 * y * (1.0 + jnp.tanh(
            0.7978845608028654 * (y + 0.044715 * y * y * y)))
    return y


# ---------------------------------------------------------------------------
# Pallas kernels
# ---------------------------------------------------------------------------
def _linear_kernel(x_ref, w_ref, b_ref, o_ref, acc_ref, *, activation):
    """Tiled matmul with K-reduction accumulator (grid = (M/tm, N/tn, K/tk))."""
    @pl.when(pl.program_id(2) == 0)
    def _():
        acc_ref[...] = jnp.zeros_like(acc_ref)

    acc_ref[...] += jnp.dot(x_ref[...], w_ref[...],
                            preferred_element_type=jnp.float32)

    @pl.when(pl.program_id(2) == pl.num_programs(2) - 1)
    def _():
        y = acc_ref[...] + b_ref[...].astype(jnp.float32)   # (1, tn) bias bcast
        o_ref[...] = _maybe_gelu(y, activation).astype(o_ref.dtype)


def _linear_kernel_single_k(x_ref, w_ref, b_ref, o_ref, *, activation):
    """Fast path: whole K fits one tile -> no scratch accumulator needed."""
    y = jnp.dot(x_ref[...], w_ref[...], preferred_element_type=jnp.float32)
    y = y + b_ref[...].astype(jnp.float32)
    o_ref[...] = _maybe_gelu(y, activation).astype(o_ref.dtype)


def linear_pallas(x, w, b, activation=None, out_dtype=None):
    """y = x @ w + b (optionally GELU).  x: (M, K) bf16, w: (K, N) bf16, b: (N,) f32."""
    M, K = x.shape
    _, N = w.shape
    out_dtype = out_dtype or x.dtype

    tm = _pick_tile(M, _CFG["tm"], 8)
    tn = _pick_tile(N, _CFG["tn"], 128)
    tk = _pick_tile(K, _CFG["tk"], 128)
    kt = K // tk

    if kt == 1:
        # No K reduction across grid steps -> skip the VMEM accumulator.
        kern = functools.partial(_linear_kernel_single_k, activation=activation)
        return pl.pallas_call(
            kern,
            out_shape=jax.ShapeDtypeStruct((M, N), out_dtype),
            grid=(M // tm, N // tn),
            in_specs=[
                pl.BlockSpec((tm, K), lambda i, j: (i, 0)),
                pl.BlockSpec((K, tn), lambda i, j: (0, j)),
                pl.BlockSpec((1, tn), lambda i, j: (0, j)),
            ],
            out_specs=pl.BlockSpec((tm, tn), lambda i, j: (i, j)),
            compiler_params=_cparams(("parallel", "parallel")),
        )(x, w, b.reshape(1, N))

    kern = functools.partial(_linear_kernel, activation=activation)
    return pl.pallas_call(
        kern,
        out_shape=jax.ShapeDtypeStruct((M, N), out_dtype),
        grid=(M // tm, N // tn, kt),   # reduction axis last
        in_specs=[
            pl.BlockSpec((tm, tk), lambda i, j, k: (i, k)),
            pl.BlockSpec((tk, tn), lambda i, j, k: (k, j)),
            pl.BlockSpec((1, tn), lambda i, j, k: (0, j)),
        ],
        out_specs=pl.BlockSpec((tm, tn), lambda i, j, k: (i, j)),
        scratch_shapes=[pltpu.VMEM((tm, tn), jnp.float32)],
        compiler_params=_cparams(("parallel", "parallel", "arbitrary")),
    )(x, w, b.reshape(1, N))


def _ln_kernel(x_ref, g_ref, b_ref, o_ref):
    x = x_ref[...].astype(jnp.float32)
    mean = jnp.mean(x, axis=-1, keepdims=True)
    var = jnp.mean((x - mean) ** 2, axis=-1, keepdims=True)
    y = (x - mean) * lax.rsqrt(var + 1e-5)
    o_ref[...] = (y * g_ref[...] + b_ref[...]).astype(o_ref.dtype)


def _ln_residual_kernel(x_ref, r_ref, g_ref, b_ref, o_ref):
    # residual add fused into the layernorm (saves one HBM round trip).
    x = x_ref[...].astype(jnp.float32) + r_ref[...].astype(jnp.float32)
    mean = jnp.mean(x, axis=-1, keepdims=True)
    var = jnp.mean((x - mean) ** 2, axis=-1, keepdims=True)
    y = (x - mean) * lax.rsqrt(var + 1e-5)
    o_ref[...] = (y * g_ref[...] + b_ref[...]).astype(o_ref.dtype)


def layernorm_pallas(x, g, b, residual=None, out_dtype=jnp.bfloat16):
    """LayerNorm over the last axis (optionally fused residual add).  x: (M, D)."""
    M, D = x.shape
    tm = _pick_tile(M, 256, 8)
    grid = (M // tm,)

    row_spec = pl.BlockSpec((tm, D), lambda i: (i, 0))
    vec_spec = pl.BlockSpec((1, D), lambda i: (0, 0))

    if residual is None:
        return pl.pallas_call(
            _ln_kernel,
            out_shape=jax.ShapeDtypeStruct((M, D), out_dtype),
            grid=grid,
            in_specs=[row_spec, vec_spec, vec_spec],
            out_specs=row_spec,
            compiler_params=_cparams(("parallel",)),
        )(x, g.reshape(1, D), b.reshape(1, D))
    return pl.pallas_call(
        _ln_residual_kernel,
        out_shape=jax.ShapeDtypeStruct((M, D), out_dtype),
        grid=grid,
        in_specs=[row_spec, row_spec, vec_spec, vec_spec],
        out_specs=row_spec,
        compiler_params=_cparams(("parallel",)),
    )(x, residual, g.reshape(1, D), b.reshape(1, D))


def _attn_kernel(qkv_ref, m_ref, o_ref, *, num_heads, head_dim, scale):
    # One batch element per grid step; all heads processed here so the output
    # store is a single lane-dense (S, D) slab and per-step overhead is
    # amortized across heads.
    qkv = qkv_ref[0]                               # (S, 3D) bf16
    mask = m_ref[0].astype(jnp.float32)            # (1, S) additive key mask
    D = num_heads * head_dim

    outs = []
    for h in range(num_heads):                     # static unroll over heads
        q = qkv[:, h * head_dim:(h + 1) * head_dim]
        k = qkv[:, D + h * head_dim:D + (h + 1) * head_dim]
        v = qkv[:, 2 * D + h * head_dim:2 * D + (h + 1) * head_dim]
        # contract last axes directly: no explicit K-tile transpose.
        s = lax.dot_general(q, k, (((1,), (1,)), ((), ())),
                            preferred_element_type=jnp.float32)
        s = s * scale + mask                       # f32 mask add (keeps -1e9 exact)
        s = s - jnp.max(s, axis=-1, keepdims=True)
        p = jnp.exp(s)
        p = p * pl.reciprocal(jnp.sum(p, axis=-1, keepdims=True), approx=True)
        o = jnp.dot(p.astype(v.dtype), v, preferred_element_type=jnp.float32)
        outs.append(o)
    # single lane-dense store of the full (S, D) slab.
    o_ref[0] = jnp.concatenate(outs, axis=-1).astype(o_ref.dtype)
    # TODO(synk): for long sequences (esp. v7x 64 MiB VMEM) switch to
    # flash-style KV-block tiling with online softmax instead of the full (S,S)
    # score matrix.


def attention_pallas(qkv, add_mask, *, num_heads, head_dim, scale):
    """Softmax attention.  qkv: (B, S, 3D) bf16, add_mask: (B, 1, S) f32."""
    B, S, threeD = qkv.shape
    D = num_heads * head_dim
    kern = functools.partial(_attn_kernel, num_heads=num_heads,
                             head_dim=head_dim, scale=scale)
    return pl.pallas_call(
        kern,
        out_shape=jax.ShapeDtypeStruct((B, S, D), qkv.dtype),
        grid=(B,),
        in_specs=[
            pl.BlockSpec((1, S, threeD), lambda b: (b, 0, 0)),
            pl.BlockSpec((1, 1, S), lambda b: (b, 0, 0)),
        ],
        out_specs=pl.BlockSpec((1, S, D), lambda b: (b, 0, 0)),
        compiler_params=_cparams(("parallel",)),
    )(qkv, add_mask)


# ---------------------------------------------------------------------------
# Deterministic parameter construction (synthetic mini-RoBERTa + classifier)
# ---------------------------------------------------------------------------
def init_params(key, *, vocab, max_pos, hidden, heads, ffn, layers, num_tags):
    # TODO(synk): pretrained RoBERTa weight loading (and HF's position-id offset
    # of padding_idx+1) is not reproducible here; a synthetic encoder is used.
    def nrm(k, shape, scale=0.02):
        return scale * jax.random.normal(k, shape, dtype=jnp.float32)

    keys = iter(jax.random.split(key, 8 + layers * 8))
    params = {
        "hidden": hidden,
        "num_heads": heads,
        "tok_emb": nrm(next(keys), (vocab, hidden)),
        "pos_emb": nrm(next(keys), (max_pos, hidden)),
        "emb_ln_g": jnp.ones((hidden,), jnp.float32),
        "emb_ln_b": jnp.zeros((hidden,), jnp.float32),
        "layers": [],
        "cls_w": nrm(next(keys), (hidden, num_tags)).astype(jnp.bfloat16),
        "cls_b": jnp.zeros((num_tags,), jnp.float32),
    }
    for _ in range(layers):
        wq = nrm(next(keys), (hidden, hidden))
        wk = nrm(next(keys), (hidden, hidden))
        wv = nrm(next(keys), (hidden, hidden))
        layer = {
            # fused Q/K/V projection weight: one matmul instead of three.
            "w_qkv": jnp.concatenate([wq, wk, wv], axis=1).astype(jnp.bfloat16),
            "b_qkv": jnp.zeros((3 * hidden,), jnp.float32),
            "wo": nrm(next(keys), (hidden, hidden)).astype(jnp.bfloat16),
            "bo": jnp.zeros((hidden,), jnp.float32),
            "ln1_g": jnp.ones((hidden,), jnp.float32),
            "ln1_b": jnp.zeros((hidden,), jnp.float32),
            "w1": nrm(next(keys), (hidden, ffn)).astype(jnp.bfloat16),
            "b1": jnp.zeros((ffn,), jnp.float32),
            "w2": nrm(next(keys), (ffn, hidden)).astype(jnp.bfloat16),
            "b2": jnp.zeros((hidden,), jnp.float32),
            "ln2_g": jnp.ones((hidden,), jnp.float32),
            "ln2_b": jnp.zeros((hidden,), jnp.float32),
        }
        params["layers"].append(layer)
    return params


# ---------------------------------------------------------------------------
# Forward pass (equivalent of RelationClassifier.forward)
# ---------------------------------------------------------------------------
def relation_classifier_forward(params, tokens_id, attention_mask):
    B, S = tokens_id.shape
    D = params["hidden"]
    H = params["num_heads"]
    Dh = D // H
    scale = 1.0 / math.sqrt(Dh)

    # Embeddings (gather is glue; layernorm runs in Pallas, outputs bf16).
    x = params["tok_emb"][tokens_id] + params["pos_emb"][:S][None, :, :]
    x = layernorm_pallas(x.reshape(B * S, D),
                         params["emb_ln_g"], params["emb_ln_b"])       # (B*S, D) bf16

    # Additive attention mask: 0 for real tokens, -1e9 for padding. (B, 1, S) f32,
    # indexed per batch inside the attention kernel (no H-fold replication).
    add_mask = ((1.0 - attention_mask.astype(jnp.float32)) * (-1e9)).reshape(B, 1, S)

    for layer in params["layers"]:
        # Fused QKV projection: one (B*S, D) @ (D, 3D) matmul.
        qkv = linear_pallas(x, layer["w_qkv"], layer["b_qkv"])          # (B*S, 3D)
        attn = attention_pallas(qkv.reshape(B, S, 3 * D), add_mask,
                                num_heads=H, head_dim=Dh, scale=scale)  # (B, S, D)
        attn = linear_pallas(attn.reshape(B * S, D), layer["wo"], layer["bo"])
        # residual add fused into layernorm.
        x = layernorm_pallas(attn, layer["ln1_g"], layer["ln1_b"], residual=x)
        h = linear_pallas(x, layer["w1"], layer["b1"], activation="gelu")
        h = linear_pallas(h, layer["w2"], layer["b2"])
        x = layernorm_pallas(h, layer["ln2_g"], layer["ln2_b"], residual=x)

    x = x.reshape(B, S, D)
    # CLS_emb = encoded_layers[:, 0, :]
    cls_emb = x[:, 0, :]                                                # (B, D)
    # output = self.classifier(CLS_emb)
    logits = linear_pallas(cls_emb, params["cls_w"], params["cls_b"],
                           out_dtype=jnp.float32)                       # (B, num_tags)
    return logits


# ---------------------------------------------------------------------------
if __name__ == "__main__":
    B, S = 2, 8
    HIDDEN, HEADS, FFN, LAYERS = 32, 2, 64, 2
    VOCAB, MAX_POS, NUM_TAGS = 50, 16, 5

    key = jax.random.PRNGKey(0)
    k_params, k_tok = jax.random.split(key)

    params = init_params(
        k_params, vocab=VOCAB, max_pos=MAX_POS, hidden=HIDDEN,
        heads=HEADS, ffn=FFN, layers=LAYERS, num_tags=NUM_TAGS,
    )

    tokens_id = jax.random.randint(k_tok, (B, S), 0, VOCAB, dtype=jnp.int32)
    attention_mask = jnp.array(
        [[1, 1, 1, 1, 1, 1, 1, 1],
         [1, 1, 1, 1, 1, 1, 0, 0]], dtype=jnp.int32)

    logits = relation_classifier_forward(params, tokens_id, attention_mask)
    jax.block_until_ready(logits)
    assert logits.shape == (B, NUM_TAGS)
    print("KERNEL_OK")
</pallas_src>

<mosaic_0001>
module attributes {stable_mosaic.version = 11 : i64} {
  func.func @_ln_kernel(%arg0: i32, %arg1: memref<16x32xf32, #tpu.memory_space<vmem>>, %arg2: memref<1x32xf32, #tpu.memory_space<vmem>>, %arg3: memref<1x32xf32, #tpu.memory_space<vmem>>, %arg4: memref<16x32xbf16, #tpu.memory_space<vmem>>) attributes {dimension_semantics = [#tpu.dimension_semantics<parallel>], iteration_bounds = array<i64: 1>, scalar_prefetch = 0 : i64, scratch_operands = 0 : i64, tpu.core_type = #tpu.core_type<tc>, window_params = [{transform_indices = @transform_0, window_bounds = array<i64: 16, 32>}, {pipeline_mode = #tpu.pipeline_mode<synchronous>, transform_indices = @transform_1, window_bounds = array<i64: 1, 32>}, {pipeline_mode = #tpu.pipeline_mode<synchronous>, transform_indices = @transform_2, window_bounds = array<i64: 1, 32>}, {transform_indices = @transform_3, window_bounds = array<i64: 16, 32>}]} {
    %c0 = arith.constant 0 : index
    %c0_0 = arith.constant 0 : index
    %0 = vector.load %arg1[%c0, %c0_0] : memref<16x32xf32, #tpu.memory_space<vmem>>, vector<16x32xf32>
    %cst = arith.constant dense<0.000000e+00> : vector<16xf32>
    %1 = vector.multi_reduction <add>, %0, %cst [1] : vector<16x32xf32> to vector<16xf32>
    %2 = vector.shape_cast %1 : vector<16xf32> to vector<16x1xf32>
    %cst_1 = arith.constant 3.200000e+01 : f32
    %3 = vector.broadcast %cst_1 : f32 to vector<16x1xf32>
    %4 = arith.divf %2, %3 : vector<16x1xf32>
    %5 = vector.broadcast %4 : vector<16x1xf32> to vector<16x32xf32>
    %6 = arith.subf %0, %5 : vector<16x32xf32>
    %7 = arith.mulf %6, %6 : vector<16x32xf32>
    %cst_2 = arith.constant dense<0.000000e+00> : vector<16xf32>
    %8 = vector.multi_reduction <add>, %7, %cst_2 [1] : vector<16x32xf32> to vector<16xf32>
    %9 = vector.shape_cast %8 : vector<16xf32> to vector<16x1xf32>
    %cst_3 = arith.constant 3.200000e+01 : f32
    %10 = vector.broadcast %cst_3 : f32 to vector<16x1xf32>
    %11 = arith.divf %9, %10 : vector<16x1xf32>
    %12 = vector.broadcast %4 : vector<16x1xf32> to vector<16x32xf32>
    %13 = arith.subf %0, %12 : vector<16x32xf32>
    %cst_4 = arith.constant 9.99999974E-6 : f32
    %14 = vector.broadcast %cst_4 : f32 to vector<16x1xf32>
    %15 = arith.addf %11, %14 : vector<16x1xf32>
    %16 = math.rsqrt %15 : vector<16x1xf32>
    %17 = vector.broadcast %16 : vector<16x1xf32> to vector<16x32xf32>
    %18 = arith.mulf %13, %17 : vector<16x32xf32>
    %c0_5 = arith.constant 0 : index
    %c0_6 = arith.constant 0 : index
    %19 = vector.load %arg2[%c0_5, %c0_6] : memref<1x32xf32, #tpu.memory_space<vmem>>, vector<1x32xf32>
    %20 = vector.broadcast %19 : vector<1x32xf32> to vector<16x32xf32>
    %21 = arith.mulf %18, %20 : vector<16x32xf32>
    %c0_7 = arith.constant 0 : index
    %c0_8 = arith.constant 0 : index
    %22 = vector.load %arg3[%c0_7, %c0_8] : memref<1x32xf32, #tpu.memory_space<vmem>>, vector<1x32xf32>
    %23 = vector.broadcast %22 : vector<1x32xf32> to vector<16x32xf32>
    %24 = arith.addf %21, %23 : vector<16x32xf32>
    %25 = arith.truncf %24 : vector<16x32xf32> to vector<16x32xbf16>
    %c0_9 = arith.constant 0 : index
    %c0_10 = arith.constant 0 : index
    %26 = vector.load %arg4[%c0_9, %c0_10] : memref<16x32xbf16, #tpu.memory_space<vmem>>, vector<16x32xbf16>
    tpu.vector_store %arg4[%c0_9, %c0_10], %25 {strides = array<i32>} : memref<16x32xbf16, #tpu.memory_space<vmem>>, vector<16x32xbf16>,
    return
  }
  func.func @transform_0(%arg0: i32) -> (i32, i32) {
    %c0_i32 = arith.constant 0 : i32
    %c0_i32_0 = arith.constant 0 : i32
    return %arg0, %c0_i32 : i32, i32
  }
  func.func @transform_1(%arg0: i32) -> (i32, i32) {
    %c0_i32 = arith.constant 0 : i32
    %c0_i32_0 = arith.constant 0 : i32
    %c0_i32_1 = arith.constant 0 : i32
    return %c0_i32, %c0_i32_0 : i32, i32
  }
  func.func @transform_2(%arg0: i32) -> (i32, i32) {
    %c0_i32 = arith.constant 0 : i32
    %c0_i32_0 = arith.constant 0 : i32
    %c0_i32_1 = arith.constant 0 : i32
    return %c0_i32, %c0_i32_0 : i32, i32
  }
  func.func @transform_3(%arg0: i32) -> (i32, i32) {
    %c0_i32 = arith.constant 0 : i32
    %c0_i32_0 = arith.constant 0 : i32
    return %arg0, %c0_i32 : i32, i32
  }
}

</mosaic_0001>

<llo_original>
// kernel: tpu_custom_call.1
$region0: #{tpu_custom_call.1}
  #allocation0 [shape = 'u32[]', space=smem, size = 0x4, offset = 0x4, fixed_abs, tag = 'smem constant byte address 0x4 - core index']
  #allocation1 [shape = 'u32[72,128]{1,0:T(1,128)}', space=vmem, size = 0x9000, scoped, tag = 'internal scratch']
  %s0 = inlined_call_operand.hbm [shape: f32[16,32], index: 0, kind: input, shape index: {}]
  %s1 = inlined_call_operand.hbm [shape: f32[1,32], index: 1, kind: input, shape index: {}]
  %s2 = inlined_call_operand.vmem [shape: f32[1,32], index: 2, kind: input, shape index: {}]
  %s3 = inlined_call_operand.hbm [shape: bf16[16,32], index: 3, kind: output, shape index: {}]
  %s4 = sld [smem:[#allocation0]]
  $region30: #{tpu_custom_call.1} parent=0
    _
  %s6 = ssub.s32 1, %s4
  %s7 = scalar_select 0, %s6, %s4
  $region1: #{tpu_custom_call.1} parent=0
    #allocation2 [shape = 'u8[8192]{0}', space=vmem, size = 0x2000, scoped, tag = 'input window, operand 0, single buffered']
    #allocation3 [shape = 's32[1]{0}', space=sflag, size = 0x4, scoped, tag = 'scoped memory for tpu_custom_call.1']
    #allocation4 [shape = 's32[1]{0}', space=sflag, size = 0x4, scoped, tag = 'scoped memory for tpu_custom_call.1']
    #allocation5 [shape = 'u8[512]{0}', space=vmem, size = 0x400, scoped, tag = 'input window, operand 1, single buffered']
    #allocation6 [shape = 's32[1]{0}', space=sflag, size = 0x4, scoped, tag = 'scoped memory for tpu_custom_call.1']
    #allocation7 [shape = 'u8[4096]{0}', space=vmem, size = 0x1000, scoped, tag = 'output window, operand 0, single buffered']
    %8 = vsyncpa [#allocation3], 0
    %9 = vsyncpa [#allocation6], 0
    %10 = vsyncpa [#allocation4], 0
    // Predicated region
    $region2: #{tpu_custom_call.1} parent=1 // pred_check
      _
    $region3: #{tpu_custom_call.1} parent=1 // pred_check_branch
      %12 = sbr.rel (0) target = $region5
    $region4: #{tpu_custom_call.1} parent=1 // pred_region
      %14 = vsyncadd [#allocation3], 0
      %s15 = sshll.u32 %s0, 4
      %s16 = int_to_ptr.hbm [resolvable:$true] %s15
      %s17 = sshll.u32 [#allocation2], 4
      %s18 = int_to_ptr.vmem [resolvable:$true] %s17
      %23 = dma.hbm_to_vmem [thread:$0]  %s16, 256, %s18, [#allocation3], 128, 128, 8
    $region5: #{tpu_custom_call.1} parent=1 // pred_fallthru
      _
    // Predicated region
    $region6: #{tpu_custom_call.1} parent=1 // pred_check
      _
    $region7: #{tpu_custom_call.1} parent=1 // pred_check_branch
      %25 = sbr.rel (0) target = $region9
    $region8: #{tpu_custom_call.1} parent=1 // pred_region
      %27 = vsyncadd [#allocation6], 0
      %s29 = sshll.u32 %s1, 4
      %s30 = int_to_ptr.hbm [resolvable:$true] %s29
      %s31 = sshll.u32 [#allocation5], 4
      %s32 = int_to_ptr.vmem [resolvable:$true] %s31
      %34 = dma.hbm_to_vmem [thread:$0]  %s30, 16, %s32, [#allocation6]
    $region9: #{tpu_custom_call.1} parent=1 // pred_fallthru
      _
    // Predicated region
    $region10: #{tpu_custom_call.1} parent=1 // pred_check
      _
    $region11: #{tpu_custom_call.1} parent=1 // pred_check_branch
      %36 = sbr.rel (0) target = $region13
    $region12: #{tpu_custom_call.1} parent=1 // pred_region
      _
    $region13: #{tpu_custom_call.1} parent=1 // pred_fallthru
      _
    // Predicated region
    $region14: #{tpu_custom_call.1} parent=1 // pred_check
      _
    $region15: #{tpu_custom_call.1} parent=1 // pred_check_branch
      %38 = sbr.rel (0) target = $region17
    $region16: #{tpu_custom_call.1} parent=1 // pred_region
      %40 = dma.done [#allocation3], 256
    $region17: #{tpu_custom_call.1} parent=1 // pred_fallthru
      _
    // Predicated region
    $region18: #{tpu_custom_call.1} parent=1 // pred_check
      _
    $region19: #{tpu_custom_call.1} parent=1 // pred_check_branch
      %42 = sbr.rel (0) target = $region21
    $region20: #{tpu_custom_call.1} parent=1 // pred_region
      %44 = dma.done [#allocation6], 16
    $region21: #{tpu_custom_call.1} parent=1 // pred_fallthru
      _
    %v45 = vld [vmem:[#allocation2] sm:$0xff]
    %v46 = vld [vmem:[#allocation2 + $0x8] sm:$0xff]
    %vm47 = vcmask 261120
    %v48 = vsel %vm47, %v45, 0.0
    %49 = vadd.xlane.f32.xlu0 %v48
    %v50 = vpop.xlane.xlu0 %49
    %v51 = vsel %vm47, %v46, 0.0
    %52 = vadd.xlane.f32.xlu0 %v51
    %v53 = vpop.xlane.xlu0 %52
    %v54 = vrcp.pop 32.0
    %v55 = vmul.f32 32.0, %v54
    %v56 = vsub.f32 1.0, %v55
    %v57 = vmul.f32 %v54, %v56
    %v58 = vadd.f32 %v54, %v57
    %vm59 = vweird.f32 %v54
    %v60 = vsel %vm59, %v54, %v58
    %v61 = vmul.f32 %v50, %v60
    %v62 = vmul.f32 %v53, %v60
    %v63 = vsub.f32 %v45, %v61
    %v64 = vsub.f32 %v46, %v62
    %v65 = vmul.f32 %v63, %v63
    %v66 = vmul.f32 %v64, %v64
    %v67 = vsel %vm47, %v65, 0.0
    %68 = vadd.xlane.f32.xlu0 %v67
    %v69 = vpop.xlane.xlu0 %68
    %v70 = vsel %vm47, %v66, 0.0
    %71 = vadd.xlane.f32.xlu0 %v70
    %v72 = vpop.xlane.xlu0 %71
    %v73 = vmul.f32 %v69, %v60
    %v74 = vmul.f32 %v72, %v60
    %v75 = vadd.f32 %v73, 1e-05
    %v76 = vadd.f32 %v74, 1e-05
    %v77 = vrsqrt.pop %v75
    %v78 = vmul.f32 %v77, %v75
    %v79 = vmul.f32 %v78, %v77
    %v80 = vmul.f32 0.5, %v79
    %v81 = vsub.f32 1.5, %v80
    %v82 = vmul.f32 %v77, %v81
    %vm83 = vweird.f32 %v75
    %vm84 = vweird.f32 %v77
    %vm85 = vmor %vm83, %vm84
    %v86 = vsel %vm85, %v77, %v82
    %v87 = vrsqrt.pop %v76
    %v88 = vmul.f32 %v87, %v76
    %v89 = vmul.f32 %v88, %v87
    %v90 = vmul.f32 0.5, %v89
    %v91 = vsub.f32 1.5, %v90
    %v92 = vmul.f32 %v87, %v91
    %vm93 = vweird.f32 %v76
    %vm94 = vweird.f32 %v87
    %vm95 = vmor %vm93, %vm94
    %v96 = vsel %vm95, %v87, %v92
    %v97 = vmul.f32 %v63, %v86
    %v98 = vmul.f32 %v64, %v96
    %v99 = vld [vmem:[#allocation5] sm:$0x1]
    %v101 = vperm.slane %v99, 0
    %v103 = vmul.f32 %v97, %v101
    %v104 = vmul.f32 %v98, %v101
    %v105 = vld [vmem:[%s2] sm:$0x1]
    %v107 = vperm.slane %v105, 0
    %v109 = vadd.f32 %v103, %v107
    %v110 = vadd.f32 %v104, %v107
    %v111 = vpack.c.bf16 %v109, %v109
    %v112 = vpack.c.bf16 %v110, %v110
    %vm113 = vcmask 257024
    %114 = vst.msk [vmem:[#allocation7] sm:$0xf] %vm113, %v111
    %115 = vst.msk [vmem:[#allocation7 + $0x4] sm:$0xf] %vm113, %v112
    // Predicated region
    $region22: #{tpu_custom_call.1} parent=1 // pred_check
      _
    $region23: #{tpu_custom_call.1} parent=1 // pred_check_branch
      %117 = sbr.rel (0) target = $region25
    $region24: #{tpu_custom_call.1} parent=1 // pred_region
      %119 = vsyncadd [#allocation4], 0
      %s120 = sshll.u32 [#allocation7], 4
      %s121 = int_to_ptr.vmem [resolvable:$true] %s120
      %s122 = sshll.u32 %s3, 4
      %s123 = int_to_ptr.hbm [resolvable:$true] %s122
      %128 = dma.vmem_to_hbm [thread:$0]  %s121, 128, %s123, [#allocation4], 64, 64, 4
    $region25: #{tpu_custom_call.1} parent=1 // pred_fallthru
      _
    // Predicated region
    $region26: #{tpu_custom_call.1} parent=1 // pred_check
      _
    $region27: #{tpu_custom_call.1} parent=1 // pred_check_branch
      %130 = sbr.rel (0) target = $region29
    $region28: #{tpu_custom_call.1} parent=1 // pred_region
      %132 = dma.done [#allocation4], 128
    $region29: #{tpu_custom_call.1} parent=1 // pred_fallthru
      _
    %133 = vsyncpa [#allocation3], 1
    %134 = vsyncpa [#allocation6], 1
    %135 = vsyncpa [#allocation4], 1

</llo_original>
